<compile_context>
chip_gen: v7x
topology: tpu7x:2x2x1
jax: 0.10.0
libtpu: 0.0.40
codegen_flags: <defaults>
</compile_context>

<pallas_src>
import jax
import jax.numpy as jnp
from jax import lax
from jax.experimental import pallas as pl
from jax.experimental.pallas import tpu as pltpu


def _get_sigmoid_kernel(first_ref, x_ref, o_ref):
    # first_ref: (1, D)  -- row 0, resident across all grid steps
    # x_ref:     (TN, D) -- current row tile of x (streamed)
    # o_ref:     (1, TN) -- matching lane-dense output tile
    s = lax.dot_general(
        first_ref[...],
        x_ref[...],
        dimension_numbers=(((1,), (1,)), ((), ())),  # contract last dim of both
        preferred_element_type=jnp.float32,          # f32 accumulate on the MXU
    )
    o_ref[...] = jax.nn.sigmoid(s).astype(o_ref.dtype)


def _choose_tile_rows(n, d, itemsize, target_tile_bytes=4 * 1024 * 1024):
    """Row-tile size: multiple of 128, big enough to amortize per-step
    overhead (~0.35 us/step), small enough that double-buffered tiles stay
    well under VMEM on every generation (v7x: 64 MiB physical)."""
    rows = (target_tile_bytes // max(1, d * itemsize)) // 128 * 128
    rows = int(max(128, min(rows, 4096)))
    if n <= rows:
        return n  # single full-extent block: always a legal block shape
    return rows


def get_sigmoid(x, *, tile_rows=None):
    """x: (N, D) array. Returns sigmoid(x[0:1] @ x[1:].T) of shape (1, N-1)."""
    n, d = x.shape
    if n <= 1:
        # Degenerate case: PyTorch returns an empty (1, 0) result.
        return jnp.zeros((1, max(n - 1, 0)), dtype=x.dtype)

    first = x[0:1]  # tiny (1, D) copy; the big operand `x` is passed whole.

    tn = tile_rows if tile_rows is not None else _choose_tile_rows(
        n, d, x.dtype.itemsize)
    num_tiles = pl.cdiv(n, tn)

    # Explicit VMEM budget: double-buffered row tile + resident first row +
    # output tile, with headroom; clamped so it is valid on v7x's 64 MiB VMEM.
    need = (2 * tn * d + d + 2 * tn) * x.dtype.itemsize + (2 << 20)
    vmem_limit = int(min(64 * 1024 * 1024, max(need, 8 * 1024 * 1024)))

    full = pl.pallas_call(
        _get_sigmoid_kernel,
        out_shape=jax.ShapeDtypeStruct((1, n), x.dtype),
        grid=(num_tiles,),
        in_specs=[
            pl.BlockSpec((1, d), lambda i: (0, 0)),   # row 0, stays resident
            pl.BlockSpec((tn, d), lambda i: (i, 0)),  # streamed row tiles of x
        ],
        out_specs=pl.BlockSpec((1, tn), lambda i: (0, i)),
        compiler_params=pltpu.CompilerParams(
            dimension_semantics=("parallel",),
            vmem_limit_bytes=vmem_limit,
        ),
    )(first, x)

    # Column 0 is sigmoid(<x[0], x[0]>); the PyTorch module starts at row 1.
    return full[:, 1:]


if __name__ == "__main__":
    key = jax.random.PRNGKey(0)

    # Small CBOW-style shapes: 8 vectors of hidden size 32.
    N, D = 8, 32
    x = jax.random.normal(key, (N, D), dtype=jnp.float32)
    out = jax.block_until_ready(get_sigmoid(x))
    ref = jax.nn.sigmoid(jnp.matmul(x[0:1], x[1:].T))
    assert out.shape == (1, N - 1), out.shape
    assert jnp.allclose(out, ref, atol=1e-5, rtol=1e-5), "mismatch vs reference"

    # Exercise the tiled / ragged-edge path (grid of 3, last tile partial).
    N2, D2 = 300, 64
    x2 = jax.random.normal(jax.random.PRNGKey(1), (N2, D2), dtype=jnp.float32)
    out2 = jax.block_until_ready(get_sigmoid(x2, tile_rows=128))
    ref2 = jax.nn.sigmoid(jnp.matmul(x2[0:1], x2[1:].T))
    assert out2.shape == (1, N2 - 1), out2.shape
    assert jnp.allclose(out2, ref2, atol=1e-5, rtol=1e-5), "mismatch (tiled path)"

    print("KERNEL_OK")
</pallas_src>

<mosaic_0001>
module attributes {stable_mosaic.version = 11 : i64} {
  func.func @_get_sigmoid_kernel(%arg0: i32, %arg1: memref<1x32xf32, #tpu.memory_space<vmem>>, %arg2: memref<8x32xf32, #tpu.memory_space<vmem>>, %arg3: memref<1x8xf32, #tpu.memory_space<vmem>>) attributes {dimension_semantics = [#tpu.dimension_semantics<parallel>], iteration_bounds = array<i64: 1>, scalar_prefetch = 0 : i64, scratch_operands = 0 : i64, tpu.core_type = #tpu.core_type<tc>, window_params = [{pipeline_mode = #tpu.pipeline_mode<synchronous>, transform_indices = @transform_0, window_bounds = array<i64: 1, 32>}, {transform_indices = @transform_1, window_bounds = array<i64: 8, 32>}, {transform_indices = @transform_2, window_bounds = array<i64: 1, 8>}]} {
    %c0 = arith.constant 0 : index
    %c0_0 = arith.constant 0 : index
    %0 = vector.load %arg1[%c0, %c0_0] : memref<1x32xf32, #tpu.memory_space<vmem>>, vector<1x32xf32>
    %c0_1 = arith.constant 0 : index
    %c0_2 = arith.constant 0 : index
    %1 = vector.load %arg2[%c0_1, %c0_2] : memref<8x32xf32, #tpu.memory_space<vmem>>, vector<8x32xf32>
    %cst = arith.constant dense<0.000000e+00> : vector<1x8xf32>
    %2 = tpu.matmul %0, %1, %cst {dimension_numbers = #tpu.dot_dimension_numbers<[1], [1], [0], [0], [0, 0, 1, 0], [], []>} : vector<1x32xf32>, vector<8x32xf32>, vector<1x8xf32> -> vector<1x8xf32>
    %3 = arith.negf %2 : vector<1x8xf32>
    %4 = math.exp %3 : vector<1x8xf32>
    %cst_3 = arith.constant 1.000000e+00 : f32
    %5 = vector.broadcast %cst_3 : f32 to vector<1x8xf32>
    %6 = arith.addf %5, %4 : vector<1x8xf32>
    %7 = arith.divf %5, %6 : vector<1x8xf32>
    %c0_4 = arith.constant 0 : index
    %c0_5 = arith.constant 0 : index
    %8 = vector.load %arg3[%c0_4, %c0_5] : memref<1x8xf32, #tpu.memory_space<vmem>>, vector<1x8xf32>
    tpu.vector_store %arg3[%c0_4, %c0_5], %7 {strides = array<i32>} : memref<1x8xf32, #tpu.memory_space<vmem>>, vector<1x8xf32>,
    return
  }
  func.func @transform_0(%arg0: i32) -> (i32, i32) {
    %c0_i32 = arith.constant 0 : i32
    %c0_i32_0 = arith.constant 0 : i32
    %c0_i32_1 = arith.constant 0 : i32
    return %c0_i32, %c0_i32_0 : i32, i32
  }
  func.func @transform_1(%arg0: i32) -> (i32, i32) {
    %c0_i32 = arith.constant 0 : i32
    %c0_i32_0 = arith.constant 0 : i32
    return %arg0, %c0_i32 : i32, i32
  }
  func.func @transform_2(%arg0: i32) -> (i32, i32) {
    %c0_i32 = arith.constant 0 : i32
    %c0_i32_0 = arith.constant 0 : i32
    return %c0_i32, %arg0 : i32, i32
  }
}

</mosaic_0001>

<llo_original>
// kernel: tpu_custom_call.1
$region0: #{tpu_custom_call.1}
  #allocation0 [shape = 'u32[]', space=smem, size = 0x4, offset = 0x4, fixed_abs, tag = 'smem constant byte address 0x4 - core index']
  #allocation1 [shape = 'u32[144,128]{1,0:T(1,128)}', space=vmem, size = 0x12000, scoped, tag = 'internal scratch']
  %s0 = inlined_call_operand.hbm [shape: f32[1,32], index: 0, kind: input, shape index: {}]
  %s1 = inlined_call_operand.hbm [shape: f32[8,32], index: 1, kind: input, shape index: {}]
  %s2 = inlined_call_operand.hbm [shape: f32[1,8], index: 2, kind: output, shape index: {}]
  %s3 = sld [smem:[#allocation0]]
  $region26: #{tpu_custom_call.1} parent=0
    _
  %s5 = ssub.s32 1, %s3
  %s6 = scalar_select 0, %s5, %s3
  $region1: #{tpu_custom_call.1} parent=0
    #allocation2 [shape = 'u8[512]{0}', space=vmem, size = 0x400, scoped, tag = 'input window, operand 0, single buffered']
    #allocation3 [shape = 's32[1]{0}', space=sflag, size = 0x4, scoped, tag = 'scoped memory for tpu_custom_call.1']
    #allocation4 [shape = 's32[1]{0}', space=sflag, size = 0x4, scoped, tag = 'scoped memory for tpu_custom_call.1']
    #allocation5 [shape = 'u8[4096]{0}', space=vmem, size = 0x1000, scoped, tag = 'input window, operand 1, single buffered']
    #allocation6 [shape = 's32[1]{0}', space=sflag, size = 0x4, scoped, tag = 'scoped memory for tpu_custom_call.1']
    #allocation7 [shape = 'u8[512]{0}', space=vmem, size = 0x400, scoped, tag = 'output window, operand 0, single buffered']
    %7 = vsyncpa [#allocation3], 0
    %8 = vsyncpa [#allocation6], 0
    %9 = vsyncpa [#allocation4], 0
    // Predicated region
    $region2: #{tpu_custom_call.1} parent=1 // pred_check
      _
    $region3: #{tpu_custom_call.1} parent=1 // pred_check_branch
      %11 = sbr.rel (0) target = $region5
    $region4: #{tpu_custom_call.1} parent=1 // pred_region
      %s13 = ssub.s32 16, 16
      %14 = vsyncadd [#allocation3], %s13
      %s16 = sshll.u32 [#allocation2], 4
      %s17 = int_to_ptr.vmem [resolvable:$true] %s16
      %19 = dma.hbm_to_vmem [thread:$0]  %s0, 16, %s17, [#allocation3]
    $region5: #{tpu_custom_call.1} parent=1 // pred_fallthru
      _
    // Predicated region
    $region6: #{tpu_custom_call.1} parent=1 // pred_check
      _
    $region7: #{tpu_custom_call.1} parent=1 // pred_check_branch
      %21 = sbr.rel (0) target = $region9
    $region8: #{tpu_custom_call.1} parent=1 // pred_region
      %s23 = ssub.s32 128, 128
      %24 = vsyncadd [#allocation6], %s23
      %s26 = sshll.u32 [#allocation5], 4
      %s27 = int_to_ptr.vmem [resolvable:$true] %s26
      %29 = dma.hbm_to_vmem [thread:$0]  %s1, 128, %s27, [#allocation6]
    $region9: #{tpu_custom_call.1} parent=1 // pred_fallthru
      _
    // Predicated region
    $region10: #{tpu_custom_call.1} parent=1 // pred_check
      _
    $region11: #{tpu_custom_call.1} parent=1 // pred_check_branch
      %31 = sbr.rel (0) target = $region13
    $region12: #{tpu_custom_call.1} parent=1 // pred_region
      %32 = dma.done [#allocation3], 16
    $region13: #{tpu_custom_call.1} parent=1 // pred_fallthru
      _
    // Predicated region
    $region14: #{tpu_custom_call.1} parent=1 // pred_check
      _
    $region15: #{tpu_custom_call.1} parent=1 // pred_check_branch
      %34 = sbr.rel (0) target = $region17
    $region16: #{tpu_custom_call.1} parent=1 // pred_region
      %35 = dma.done [#allocation6], 128
    $region17: #{tpu_custom_call.1} parent=1 // pred_fallthru
      _
    %v36 = vld [vmem:[#allocation2] sm:$0x1]
    %v37 = vld [vmem:[#allocation5] sm:$0xff]
    %vm38 = vcmask 261120
    %v40 = vsel %vm38, %v36, 0
    %v43 = vsel %vm38, %v37, 0
    %45 = vmatprep.subr.mxu0 0.0
    %46 = vmatpush1.xpose.msra.mxu0 %v43
    %47 = vmatprep.subr.mxu0 0.0
    %48 = vmatpush1.xpose.msra.mxu0 0.0
    %49 = vmatprep.subr.mxu0 0.0
    %50 = vmatpush1.xpose.msra.mxu0 0.0
    %51 = vmatprep.subr.mxu0 0.0
    %52 = vmatpush1.xpose.msra.mxu0 0.0
    %53 = vmatprep.subr.mxu0 0.0
    %54 = vmatpush1.xpose.msra.mxu0 0.0
    %55 = vmatprep.subr.mxu0 0.0
    %56 = vmatpush1.xpose.msra.mxu0 0.0
    %57 = vmatprep.subr.mxu0 0.0
    %58 = vmatpush1.xpose.msra.mxu0 0.0
    %59 = vmatprep.subr.mxu0 0.0
    %60 = vmatpush1.xpose.msra.mxu0 0.0
    %61 = vmatprep.subr.mxu0 0.0
    %62 = vmatpush1.xpose.msra.mxu0 0.0
    %63 = vmatprep.subr.mxu0 0.0
    %64 = vmatpush1.xpose.msra.mxu0 0.0
    %65 = vmatprep.subr.mxu0 0.0
    %66 = vmatpush1.xpose.msra.mxu0 0.0
    %67 = vmatprep.subr.mxu0 0.0
    %68 = vmatpush1.xpose.msra.mxu0 0.0
    %69 = vmatprep.subr.mxu0 0.0
    %70 = vmatpush1.xpose.msra.mxu0 0.0
    %71 = vmatprep.subr.mxu0 0.0
    %72 = vmatpush1.xpose.msra.mxu0 0.0
    %73 = vmatprep.subr.mxu0 0.0
    %74 = vmatpush1.xpose.msra.mxu0 0.0
    %75 = vmatprep.subr.mxu0 0.0
    %76 = vmatpush1.xpose.msra.mxu0 0.0
    %77 = vmatprep.subr.mxu0 0.0
    %78 = vmatpush1.xpose.msra.mxu0 0.0
    %79 = vmatprep.subr.mxu0 0.0
    %80 = vmatpush1.xpose.msra.mxu0 0.0
    %81 = vmatprep.subr.mxu0 0.0
    %82 = vmatpush1.xpose.msra.mxu0 0.0
    %83 = vmatprep.subr.mxu0 0.0
    %84 = vmatpush1.xpose.msra.mxu0 0.0
    %85 = vmatprep.subr.mxu0 0.0
    %86 = vmatpush1.xpose.msra.mxu0 0.0
    %87 = vmatprep.subr.mxu0 0.0
    %88 = vmatpush1.xpose.msra.mxu0 0.0
    %89 = vmatprep.subr.mxu0 0.0
    %90 = vmatpush1.xpose.msra.mxu0 0.0
    %91 = vmatprep.subr.mxu0 0.0
    %92 = vmatpush1.xpose.msra.mxu0 0.0
    %93 = vmatprep.subr.mxu0 0.0
    %94 = vmatpush1.xpose.msra.mxu0 0.0
    %95 = vmatprep.subr.mxu0 0.0
    %96 = vmatpush1.xpose.msra.mxu0 0.0
    %97 = vmatprep.subr.mxu0 0.0
    %98 = vmatpush1.xpose.msra.mxu0 0.0
    %99 = vmatprep.subr.mxu0 0.0
    %100 = vmatpush1.xpose.msra.mxu0 0.0
    %101 = vmatprep.subr.mxu0 0.0
    %102 = vmatpush1.xpose.msra.mxu0 0.0
    %103 = vmatprep.subr.mxu0 0.0
    %104 = vmatpush1.xpose.msra.mxu0 0.0
    %105 = vmatprep.subr.mxu0 0.0
    %106 = vmatpush1.xpose.msra.mxu0 0.0
    %107 = vmatprep.subr.mxu0 0.0
    %108 = vmatpush1.xpose.msra.mxu0 0.0
    %109 = vmatprep.mubr.f32.mxu0 0.0
    %110 = vmatmul.mubr.f32.gmra.mrb[0].mxu0 %v40
    %v111 = vpop.f32.mrb[0].mxu0
    %v112 = vadd.f32 0.0, %v111
    %v113 = vpop.f32.mrb[0].mxu0
    %114 = vdwg.mxu0
    %v115 = vxor.u32 %v112, 2147483648
    %v116 = vmul.f32 %v115, 1.442695
    %v117 = vpow.pop %v116
    %v118 = vadd.f32 %v117, 1.0
    %v119 = vrcp.pop %v118
    %v120 = vmul.f32 1.0, %v119
    %vm121 = vcmask 57344
    %122 = vst.msk [vmem:[#allocation7] sm:$0x1] %vm121, %v120
    // Predicated region
    $region18: #{tpu_custom_call.1} parent=1 // pred_check
      _
    $region19: #{tpu_custom_call.1} parent=1 // pred_check_branch
      %124 = sbr.rel (0) target = $region21
    $region20: #{tpu_custom_call.1} parent=1 // pred_region
      %s126 = ssub.s32 16, 16
      %127 = vsyncadd [#allocation4], %s126
      %s129 = sshll.u32 [#allocation7], 4
      %s130 = int_to_ptr.vmem [resolvable:$true] %s129
      %132 = dma.vmem_to_hbm [thread:$0]  %s130, 16, %s2, [#allocation4]
    $region21: #{tpu_custom_call.1} parent=1 // pred_fallthru
      _
    // Predicated region
    $region22: #{tpu_custom_call.1} parent=1 // pred_check
      _
    $region23: #{tpu_custom_call.1} parent=1 // pred_check_branch
      %134 = sbr.rel (0) target = $region25
    $region24: #{tpu_custom_call.1} parent=1 // pred_region
      %135 = dma.done [#allocation4], 16
    $region25: #{tpu_custom_call.1} parent=1 // pred_fallthru
      _
    %136 = vsyncpa [#allocation3], 1
    %137 = vsyncpa [#allocation6], 1
    %138 = vsyncpa [#allocation4], 1

</llo_original>
